<compile_context>
chip_gen: v7x
topology: tpu7x:2x2x1
jax: 0.10.0
libtpu: 0.0.40
codegen_flags: <defaults>
</compile_context>

<pallas_src>
import numpy as np
import jax
import jax.numpy as jnp
from jax.experimental import pallas as pl
from jax.experimental.pallas import tpu as pltpu

EPS = 1e-6


def _static_pow_fn(p):
    """f(z) = z**p for z >= eps > 0, minimising EUP issues when p is a
    positive half-integer (e.g. 6.5 -> z^6 * sqrt(z))."""
    two_p = round(2.0 * float(p))
    if two_p > 0 and abs(2.0 * float(p) - two_p) < 1e-9:
        n, has_half = two_p // 2, bool(two_p & 1)

        def pow_p(z):
            out, base, e = None, z, n
            while e > 0:                       # exponentiation by squaring (VALU muls)
                if e & 1:
                    out = base if out is None else out * base
                e >>= 1
                if e:
                    base = base * base
            if has_half:
                r = jnp.sqrt(z)                # 1 EUP sqrt instead of log+exp
                out = r if out is None else out * r
            return out

        return pow_p
    # Non-half-integer static p: exp/log with the constant folded in.
    return lambda z: jnp.exp(jnp.float32(float(p)) * jnp.log(z))


def _make_static_kernel(p):
    pow_p = _static_pow_fn(p)
    inv_p = 1.0 / float(p)

    def kernel(x_ref, a_ref, o_ref):
        # x_ref: VMEM (Tr, hw) lane-dense rows; a_ref: VMEM (hw, Bpad) bf16 weights
        z = jnp.maximum(x_ref[...].astype(jnp.float32), EPS)          # clamp(min=eps)
        zp = pow_p(z)                                                  # z ** p
        m = jnp.dot(zp.astype(jnp.bfloat16), a_ref[...],              # all bins at once (MXU)
                    preferred_element_type=jnp.float32)
        o_ref[...] = jnp.exp(jnp.log(m) * inv_p).astype(o_ref.dtype)  # m ** (1/p)

    return kernel


def _traced_kernel(pscal_ref, x_ref, a_ref, o_ref):
    # pscal_ref: SMEM (2,) = [p, 1/p]  (p is a traced / learnable parameter)
    p, inv_p = pscal_ref[0], pscal_ref[1]
    z = jnp.maximum(x_ref[...].astype(jnp.float32), EPS)
    zp = jnp.exp(p * jnp.log(z))                                       # z ** p
    m = jnp.dot(zp.astype(jnp.bfloat16), a_ref[...],
                preferred_element_type=jnp.float32)
    o_ref[...] = jnp.exp(jnp.log(m) * inv_p).astype(o_ref.dtype)       # m ** (1/p)


def _pick_row_tile(rows_total, hw, elem_bytes):
    """Row tile of the flattened [n*c, h*w] slab.

    ~4 MiB input blocks (per-grid-step overhead ~0.35us stays <2% even on
    v7x's 3.2 TB/s HBM), dtype-aware sublane alignment, and a re-split so
    large problems keep >= 4 grid steps for the megacore 'parallel' axis.
    """
    sub = {1: 32, 2: 16}.get(elem_bytes, 8)        # packed-sublane alignment
    row_bytes = hw * elem_bytes
    tr = max(sub, ((4 << 20) // row_bytes) // sub * sub)
    if rows_total <= tr:
        return rows_total                          # full dim: always legal (grid = 1)
    floor = max(sub, ((1 << 20) // row_bytes) // sub * sub)   # keep blocks >= ~1 MiB
    quarter = max(sub, (rows_total // 4) // sub * sub)        # aim for >= 4 grid steps
    return min(tr, max(quarter, floor))


def _averaging_matrix(hw, bin_num, padded_cols):
    """[hw, padded_cols] bf16 matrix: column j of bin b averages window j
    (width hw/b).  Pad columns average the whole row so m stays > 0."""
    blocks = []
    for b in bin_num:
        k = hw // b
        blocks.append(np.repeat(np.eye(b, dtype=np.float32), k, axis=0) / float(k))
    a = np.concatenate(blocks, axis=1)
    pad = padded_cols - a.shape[1]
    if pad:
        a = np.concatenate([a, np.full((hw, pad), 1.0 / hw, np.float32)], axis=1)
    return jnp.asarray(a, dtype=jnp.bfloat16)


def gemhpp_forward(x, p=6.5, bin_num=(64,)):
    """x: [n, c, h, w] -> [n, c, sum(bin_num)]  (all bins fused, one HBM read)."""
    n, c, h, w = x.shape
    hw = h * w
    for b in bin_num:
        assert hw % b == 0, "h*w must be divisible by each bin"
    total_bins = sum(bin_num)
    bpad = ((total_bins + 127) // 128) * 128       # lane-dense output width

    rows = n * c
    x2 = x.reshape(rows, hw)                       # lane-dense slab (free reshape)
    tr = _pick_row_tile(rows, hw, x2.dtype.itemsize)
    grid = (pl.cdiv(rows, tr),)
    avg_mat = _averaging_matrix(hw, bin_num, bpad)  # (hw, bpad), VMEM-resident

    # Static p (inference): bake into the kernel (cheap z**p decomposition).
    # Traced p (training): [p, 1/p] ride in SMEM, exp(p*log(z)) path.
    try:
        static_p = float(p)
    except Exception:                               # jax tracer -> not concrete
        static_p = None

    x_spec = pl.BlockSpec((tr, hw), lambda i: (i, 0))
    a_spec = pl.BlockSpec((hw, bpad), lambda i: (0, 0))   # constant index: resident
    o_spec = pl.BlockSpec((tr, bpad), lambda i: (i, 0))
    cparams = pltpu.CompilerParams(
        dimension_semantics=("parallel",),          # megacore split on v7x
        vmem_limit_bytes=48 * 1024 * 1024,          # legal on v5e/v6e/v7x, ample headroom
    )
    out_shape = jax.ShapeDtypeStruct((rows, bpad), x.dtype)

    if static_p is not None:
        out2 = pl.pallas_call(
            _make_static_kernel(static_p),
            out_shape=out_shape,
            grid=grid,
            in_specs=[x_spec, a_spec],
            out_specs=o_spec,
            compiler_params=cparams,
        )(x2, avg_mat)
    else:
        p_f32 = jnp.asarray(p, jnp.float32).reshape(())
        p_scal = jnp.stack([p_f32, 1.0 / p_f32])
        out2 = pl.pallas_call(
            _traced_kernel,
            out_shape=out_shape,
            grid=grid,
            in_specs=[
                pl.BlockSpec(memory_space=pltpu.MemorySpace.SMEM),  # [p, 1/p]
                x_spec, a_spec,
            ],
            out_specs=o_spec,
            compiler_params=cparams,
        )(p_scal, x2, avg_mat)

    # Drop lane padding; in a real network this slice fuses into the consumer,
    # so the kernel's unmasked 128-lane stores come essentially for free.
    return out2[:, :total_bins].reshape(n, c, total_bins)


def gemhpp_reference(x, p=6.5, bin_num=(64,)):
    """Pure-JAX reference mirroring the PyTorch forward."""
    n, c, h, w = x.shape
    feats = []
    for b in bin_num:
        z = x.reshape(n, c, b, (h * w) // b)
        z = jnp.maximum(z, EPS) ** p               # clamp(min=eps).pow(p)
        z = jnp.mean(z, axis=-1) ** (1.0 / p)      # avg_pool over window, pow(1/p)
        feats.append(z)
    return jnp.concatenate(feats, axis=-1)


if __name__ == "__main__":
    key = jax.random.PRNGKey(0)
    # Small shapes consistent with the module: n=2, c=4, h=16, w=16 (h*w = 256).
    n, c, h, w = 2, 4, 16, 16
    x = jax.random.normal(key, (n, c, h, w), dtype=jnp.float32)

    # Deterministic parameter init per module __init__: p = ones(1) * 6.5.
    p_param = jnp.ones((1,), jnp.float32) * 6.5

    # 1) Default single-bin config (bin_num=[64]), static-p fast path.
    out = jax.block_until_ready(gemhpp_forward(x, p=6.5, bin_num=(64,)))
    ref = gemhpp_reference(x, p=6.5, bin_num=(64,))
    assert out.shape == (n, c, 64), out.shape
    assert jnp.allclose(out, ref, rtol=2e-3, atol=1e-5), "mismatch (bins=64, static p)"

    # 2) Multi-bin pyramid fused into a single pallas_call.
    bins = (16, 32, 64)
    out_mb = jax.block_until_ready(gemhpp_forward(x, p=6.5, bin_num=bins))
    ref_mb = gemhpp_reference(x, p=6.5, bin_num=bins)
    assert out_mb.shape == (n, c, sum(bins)), out_mb.shape
    assert jnp.allclose(out_mb, ref_mb, rtol=2e-3, atol=1e-5), "mismatch (multi-bin)"

    # 3) Traced (learnable) p path, as used when p is trained under jit.
    jitted = jax.jit(lambda xx, pp: gemhpp_forward(xx, p=pp, bin_num=(64,)))
    out_tr = jax.block_until_ready(jitted(x, p_param[0]))
    assert jnp.allclose(out_tr, ref, rtol=2e-3, atol=1e-5), "mismatch (traced p)"

    print("KERNEL_OK")
</pallas_src>

<mosaic_0001>
module attributes {stable_mosaic.version = 11 : i64} {
  func.func @kernel(%arg0: i32, %arg1: memref<8x256xf32, #tpu.memory_space<vmem>>, %arg2: memref<256x128xbf16, #tpu.memory_space<vmem>>, %arg3: memref<8x128xf32, #tpu.memory_space<vmem>>) attributes {dimension_semantics = [#tpu.dimension_semantics<parallel>], iteration_bounds = array<i64: 1>, scalar_prefetch = 0 : i64, scratch_operands = 0 : i64, tpu.core_type = #tpu.core_type<tc>, window_params = [{transform_indices = @transform_0, window_bounds = array<i64: 8, 256>}, {pipeline_mode = #tpu.pipeline_mode<synchronous>, transform_indices = @transform_1, window_bounds = array<i64: 256, 128>}, {transform_indices = @transform_2, window_bounds = array<i64: 8, 128>}]} {
    %c0 = arith.constant 0 : index
    %c0_0 = arith.constant 0 : index
    %0 = vector.load %arg1[%c0, %c0_0] : memref<8x256xf32, #tpu.memory_space<vmem>>, vector<8x256xf32>
    %cst = arith.constant 9.99999997E-7 : f32
    %1 = vector.broadcast %cst : f32 to vector<8x256xf32>
    %2 = arith.maximumf %0, %1 : vector<8x256xf32>
    %3 = arith.mulf %2, %2 : vector<8x256xf32>
    %4 = arith.mulf %3, %3 : vector<8x256xf32>
    %5 = arith.mulf %3, %4 : vector<8x256xf32>
    %6 = math.sqrt %2 : vector<8x256xf32>
    %7 = arith.mulf %5, %6 : vector<8x256xf32>
    %8 = arith.truncf %7 : vector<8x256xf32> to vector<8x256xbf16>
    %c0_1 = arith.constant 0 : index
    %c0_2 = arith.constant 0 : index
    %9 = vector.load %arg2[%c0_1, %c0_2] : memref<256x128xbf16, #tpu.memory_space<vmem>>, vector<256x128xbf16>
    %cst_3 = arith.constant dense<0.000000e+00> : vector<8x128xf32>
    %10 = tpu.matmul %8, %9, %cst_3 {dimension_numbers = #tpu.dot_dimension_numbers<[1], [0], [0], [1], [0, 0, 1, 1], [], []>} : vector<8x256xbf16>, vector<256x128xbf16>, vector<8x128xf32> -> vector<8x128xf32>
    %11 = math.log %10 : vector<8x128xf32>
    %cst_4 = arith.constant 0.15384616 : f32
    %12 = vector.broadcast %cst_4 : f32 to vector<8x128xf32>
    %13 = arith.mulf %11, %12 : vector<8x128xf32>
    %14 = math.exp %13 : vector<8x128xf32>
    %c0_5 = arith.constant 0 : index
    %c0_6 = arith.constant 0 : index
    %15 = vector.load %arg3[%c0_5, %c0_6] : memref<8x128xf32, #tpu.memory_space<vmem>>, vector<8x128xf32>
    tpu.vector_store %arg3[%c0_5, %c0_6], %14 {strides = array<i32>} : memref<8x128xf32, #tpu.memory_space<vmem>>, vector<8x128xf32>,
    return
  }
  func.func @transform_0(%arg0: i32) -> (i32, i32) {
    %c0_i32 = arith.constant 0 : i32
    %c0_i32_0 = arith.constant 0 : i32
    return %arg0, %c0_i32 : i32, i32
  }
  func.func @transform_1(%arg0: i32) -> (i32, i32) {
    %c0_i32 = arith.constant 0 : i32
    %c0_i32_0 = arith.constant 0 : i32
    %c0_i32_1 = arith.constant 0 : i32
    return %c0_i32, %c0_i32_0 : i32, i32
  }
  func.func @transform_2(%arg0: i32) -> (i32, i32) {
    %c0_i32 = arith.constant 0 : i32
    %c0_i32_0 = arith.constant 0 : i32
    return %arg0, %c0_i32 : i32, i32
  }
}

</mosaic_0001>

<llo_original>
// kernel: tpu_custom_call.1
$region0: #{tpu_custom_call.1}
  #allocation0 [shape = 'u32[]', space=smem, size = 0x4, offset = 0x4, fixed_abs, tag = 'smem constant byte address 0x4 - core index']
  #allocation1 [shape = 'u32[144,128]{1,0:T(1,128)}', space=vmem, size = 0x12000, scoped, tag = 'internal scratch']
  %s0 = inlined_call_operand.hbm [shape: f32[8,256], index: 0, kind: input, shape index: {}]
  %s1 = inlined_call_operand.hbm [shape: bf16[256,128], index: 1, kind: input, shape index: {}]
  %s2 = inlined_call_operand.hbm [shape: f32[8,128], index: 2, kind: output, shape index: {}]
  %s3 = sld [smem:[#allocation0]]
  $region26: #{tpu_custom_call.1} parent=0
    _
  %s5 = ssub.s32 1, %s3
  %s6 = scalar_select 0, %s5, %s3
  $region1: #{tpu_custom_call.1} parent=0
    #allocation2 [shape = 'u8[8192]{0}', space=vmem, size = 0x2000, scoped, tag = 'input window, operand 0, single buffered']
    #allocation3 [shape = 's32[1]{0}', space=sflag, size = 0x4, scoped, tag = 'scoped memory for tpu_custom_call.1']
    #allocation4 [shape = 's32[1]{0}', space=sflag, size = 0x4, scoped, tag = 'scoped memory for tpu_custom_call.1']
    #allocation5 [shape = 'u8[65536]{0}', space=vmem, size = 0x10000, scoped, tag = 'input window, operand 1, single buffered']
    #allocation6 [shape = 's32[1]{0}', space=sflag, size = 0x4, scoped, tag = 'scoped memory for tpu_custom_call.1']
    #allocation7 [shape = 'u8[4096]{0}', space=vmem, size = 0x1000, scoped, tag = 'output window, operand 0, single buffered']
    %7 = vsyncpa [#allocation3], 0
    %8 = vsyncpa [#allocation6], 0
    %9 = vsyncpa [#allocation4], 0
    // Predicated region
    $region2: #{tpu_custom_call.1} parent=1 // pred_check
      _
    $region3: #{tpu_custom_call.1} parent=1 // pred_check_branch
      %11 = sbr.rel (0) target = $region5
    $region4: #{tpu_custom_call.1} parent=1 // pred_region
      %s13 = ssub.s32 256, 256
      %14 = vsyncadd [#allocation3], %s13
      %s16 = sshll.u32 [#allocation2], 4
      %s17 = int_to_ptr.vmem [resolvable:$true] %s16
      %19 = dma.hbm_to_vmem [thread:$0]  %s0, 256, %s17, [#allocation3]
    $region5: #{tpu_custom_call.1} parent=1 // pred_fallthru
      _
    // Predicated region
    $region6: #{tpu_custom_call.1} parent=1 // pred_check
      _
    $region7: #{tpu_custom_call.1} parent=1 // pred_check_branch
      %21 = sbr.rel (0) target = $region9
    $region8: #{tpu_custom_call.1} parent=1 // pred_region
      %s23 = ssub.s32 2048, 2048
      %24 = vsyncadd [#allocation6], %s23
      %s25 = sshll.u32 [#allocation5], 4
      %s26 = int_to_ptr.vmem [resolvable:$true] %s25
      %31 = dma.hbm_to_vmem [thread:$0]  %s1, 2048, %s26, [#allocation6], 64, 64, 4
    $region9: #{tpu_custom_call.1} parent=1 // pred_fallthru
      _
    // Predicated region
    $region10: #{tpu_custom_call.1} parent=1 // pred_check
      _
    $region11: #{tpu_custom_call.1} parent=1 // pred_check_branch
      %33 = sbr.rel (0) target = $region13
    $region12: #{tpu_custom_call.1} parent=1 // pred_region
      %34 = dma.done [#allocation3], 256
    $region13: #{tpu_custom_call.1} parent=1 // pred_fallthru
      _
    // Predicated region
    $region14: #{tpu_custom_call.1} parent=1 // pred_check
      _
    $region15: #{tpu_custom_call.1} parent=1 // pred_check_branch
      %36 = sbr.rel (0) target = $region17
    $region16: #{tpu_custom_call.1} parent=1 // pred_region
      %37 = dma.done [#allocation6], 2048
    $region17: #{tpu_custom_call.1} parent=1 // pred_fallthru
      _
    %v39 = vld [vmem:[#allocation2] sm:$0xff]
    %v40 = vld [vmem:[#allocation2 + $0x8] sm:$0xff]
    %v41 = vmax.f32 %v39, 1e-06
    %v42 = vmax.f32 %v40, 1e-06
    %v43 = vmul.f32 %v41, %v41
    %v44 = vmul.f32 %v42, %v42
    %v45 = vmul.f32 %v43, %v43
    %v46 = vmul.f32 %v44, %v44
    %v47 = vmul.f32 %v43, %v45
    %v48 = vmul.f32 %v44, %v46
    %v49 = vrsqrt.pop %v41
    %v50 = vmul.f32 %v41, %v49
    %vm51 = vcmp.eq.f32.partialorder %v41, inf
    %v52 = vsel %vm51, %v41, %v50
    %vm53 = vcmp.eq.f32.partialorder %v41, 0.0
    %v54 = vand.u32 %v41, 2147483648
    %v55 = vsel %vm53, %v54, %v52
    %v56 = vrsqrt.pop %v42
    %v57 = vmul.f32 %v42, %v56
    %vm58 = vcmp.eq.f32.partialorder %v42, inf
    %v59 = vsel %vm58, %v42, %v57
    %vm60 = vcmp.eq.f32.partialorder %v42, 0.0
    %v61 = vand.u32 %v42, 2147483648
    %v62 = vsel %vm60, %v61, %v59
    %v63 = vmul.f32 %v47, %v55
    %v64 = vmul.f32 %v48, %v62
    %v65 = vpack.c.bf16 %v63, %v63
    %v66 = vpack.c.bf16 %v64, %v64
    %v67 = vld [vmem:[#allocation5] sm:$0xf]
    %v68 = vld [vmem:[#allocation5 + $0x4] sm:$0xf]
    %v69 = vld [vmem:[#allocation5 + $0x8] sm:$0xf]
    %v70 = vld [vmem:[#allocation5 + $0xc] sm:$0xf]
    %v71 = vld [vmem:[#allocation5 + $0x10] sm:$0xf]
    %v72 = vld [vmem:[#allocation5 + $0x14] sm:$0xf]
    %v73 = vld [vmem:[#allocation5 + $0x18] sm:$0xf]
    %v74 = vld [vmem:[#allocation5 + $0x1c] sm:$0xf]
    %v75 = vld [vmem:[#allocation5 + $0x20] sm:$0xf]
    %v76 = vld [vmem:[#allocation5 + $0x24] sm:$0xf]
    %v77 = vld [vmem:[#allocation5 + $0x28] sm:$0xf]
    %v78 = vld [vmem:[#allocation5 + $0x2c] sm:$0xf]
    %v79 = vld [vmem:[#allocation5 + $0x30] sm:$0xf]
    %v80 = vld [vmem:[#allocation5 + $0x34] sm:$0xf]
    %v81 = vld [vmem:[#allocation5 + $0x38] sm:$0xf]
    %v82 = vld [vmem:[#allocation5 + $0x3c] sm:$0xf]
    %v83 = vld [vmem:[#allocation5 + $0x40] sm:$0xf]
    %v84 = vld [vmem:[#allocation5 + $0x44] sm:$0xf]
    %v85 = vld [vmem:[#allocation5 + $0x48] sm:$0xf]
    %v86 = vld [vmem:[#allocation5 + $0x4c] sm:$0xf]
    %v87 = vld [vmem:[#allocation5 + $0x50] sm:$0xf]
    %v88 = vld [vmem:[#allocation5 + $0x54] sm:$0xf]
    %v89 = vld [vmem:[#allocation5 + $0x58] sm:$0xf]
    %v90 = vld [vmem:[#allocation5 + $0x5c] sm:$0xf]
    %v91 = vld [vmem:[#allocation5 + $0x60] sm:$0xf]
    %v92 = vld [vmem:[#allocation5 + $0x64] sm:$0xf]
    %v93 = vld [vmem:[#allocation5 + $0x68] sm:$0xf]
    %v94 = vld [vmem:[#allocation5 + $0x6c] sm:$0xf]
    %v95 = vld [vmem:[#allocation5 + $0x70] sm:$0xf]
    %v96 = vld [vmem:[#allocation5 + $0x74] sm:$0xf]
    %v97 = vld [vmem:[#allocation5 + $0x78] sm:$0xf]
    %v98 = vld [vmem:[#allocation5 + $0x7c] sm:$0xf]
    %v131 = vunpack.c.l.b16 %v67
    %v132 = vunpack.c.l.b16 %v68
    %v133 = vunpack.c.l.b16 %v69
    %v134 = vunpack.c.l.b16 %v70
    %v135 = vunpack.c.l.b16 %v71
    %v136 = vunpack.c.l.b16 %v72
    %v137 = vunpack.c.l.b16 %v73
    %v138 = vunpack.c.l.b16 %v74
    %v139 = vunpack.c.l.b16 %v75
    %v140 = vunpack.c.l.b16 %v76
    %v141 = vunpack.c.l.b16 %v77
    %v142 = vunpack.c.l.b16 %v78
    %v143 = vunpack.c.l.b16 %v79
    %v144 = vunpack.c.l.b16 %v80
    %v145 = vunpack.c.l.b16 %v81
    %v146 = vunpack.c.l.b16 %v82
    %v147 = vunpack.c.l.b16 %v83
    %v148 = vunpack.c.l.b16 %v84
    %v149 = vunpack.c.l.b16 %v85
    %v150 = vunpack.c.l.b16 %v86
    %v151 = vunpack.c.l.b16 %v87
    %v152 = vunpack.c.l.b16 %v88
    %v153 = vunpack.c.l.b16 %v89
    %v154 = vunpack.c.l.b16 %v90
    %v155 = vunpack.c.l.b16 %v91
    %v156 = vunpack.c.l.b16 %v92
    %v157 = vunpack.c.l.b16 %v93
    %v158 = vunpack.c.l.b16 %v94
    %v159 = vunpack.c.l.b16 %v95
    %v160 = vunpack.c.l.b16 %v96
    %v161 = vunpack.c.l.b16 %v97
    %v162 = vunpack.c.l.b16 %v98
    %v163 = vpack.c.b16 %v132, %v131
    %v164 = vpack.c.b16 %v134, %v133
    %v165 = vpack.c.b16 %v136, %v135
    %v166 = vpack.c.b16 %v138, %v137
    %v167 = vpack.c.b16 %v140, %v139
    %v168 = vpack.c.b16 %v142, %v141
    %v169 = vpack.c.b16 %v144, %v143
    %v170 = vpack.c.b16 %v146, %v145
    %v171 = vpack.c.b16 %v148, %v147
    %v172 = vpack.c.b16 %v150, %v149
    %v173 = vpack.c.b16 %v152, %v151
    %v174 = vpack.c.b16 %v154, %v153
    %v175 = vpack.c.b16 %v156, %v155
    %v176 = vpack.c.b16 %v158, %v157
    %v177 = vpack.c.b16 %v160, %v159
    %v178 = vpack.c.b16 %v162, %v161
    %195 = vmatprep.subr.bf16.mxu0 0
    %196 = vmatpush1.bf16.msra.mxu0 %v163
    %197 = vmatprep.subr.bf16.mxu0 0
    %198 = vmatpush1.bf16.msra.mxu0 %v164
    %199 = vmatprep.subr.bf16.mxu0 0
    %200 = vmatpush1.bf16.msra.mxu0 %v165
    %201 = vmatprep.subr.bf16.mxu0 0
    %202 = vmatpush1.bf16.msra.mxu0 %v166
    %203 = vmatprep.subr.bf16.mxu0 0
    %204 = vmatpush1.bf16.msra.mxu0 %v167
    %205 = vmatprep.subr.bf16.mxu0 0
    %206 = vmatpush1.bf16.msra.mxu0 %v168
    %207 = vmatprep.subr.bf16.mxu0 0
    %208 = vmatpush1.bf16.msra.mxu0 %v169
    %209 = vmatprep.subr.bf16.mxu0 0
    %210 = vmatpush1.bf16.msra.mxu0 %v170
    %211 = vmatprep.subr.bf16.mxu0 0
    %212 = vmatpush1.bf16.msra.mxu0 %v171
    %213 = vmatprep.subr.bf16.mxu0 0
    %214 = vmatpush1.bf16.msra.mxu0 %v172
    %215 = vmatprep.subr.bf16.mxu0 0
    %216 = vmatpush1.bf16.msra.mxu0 %v173
    %217 = vmatprep.subr.bf16.mxu0 0
    %218 = vmatpush1.bf16.msra.mxu0 %v174
    %219 = vmatprep.subr.bf16.mxu0 0
    %220 = vmatpush1.bf16.msra.mxu0 %v175
    %221 = vmatprep.subr.bf16.mxu0 0
    %222 = vmatpush1.bf16.msra.mxu0 %v176
    %223 = vmatprep.subr.bf16.mxu0 0
    %224 = vmatpush1.bf16.msra.mxu0 %v177
    %225 = vmatprep.subr.bf16.mxu0 0
    %226 = vmatpush1.bf16.msra.mxu0 %v178
    %227 = vmatprep.mubr.bf16.mxu0 %v66
    %228 = vmatmul.mubr.bf16.gmra.mrb[0].mxu0 %v65
    %v229 = vpop.f32.mrb[0].mxu0
    %v230 = vadd.f32 0.0, %v229
    %v231 = vpop.f32.mrb[0].mxu0
    %v232 = vpop.f32.mrb[0].mxu0
    %v233 = vpop.f32.mrb[0].mxu0
    %234 = vdwg.mxu0
    %v235 = vlog2.pop %v230
    %v236 = vmul.f32 %v235, 0.6931472
    %v237 = vmul.f32 %v236, 0.15384616
    %v238 = vmul.f32 %v237, 1.442695
    %v239 = vpow.pop %v238
    %240 = vst [vmem:[#allocation7] sm:$0xff] %v239
    // Predicated region
    $region18: #{tpu_custom_call.1} parent=1 // pred_check
      _
    $region19: #{tpu_custom_call.1} parent=1 // pred_check_branch
      %242 = sbr.rel (0) target = $region21
    $region20: #{tpu_custom_call.1} parent=1 // pred_region
      %s244 = ssub.s32 128, 128
      %245 = vsyncadd [#allocation4], %s244
      %s247 = sshll.u32 [#allocation7], 4
      %s248 = int_to_ptr.vmem [resolvable:$true] %s247
      %250 = dma.vmem_to_hbm [thread:$0]  %s248, 128, %s2, [#allocation4]
    $region21: #{tpu_custom_call.1} parent=1 // pred_fallthru
      _
    // Predicated region
    $region22: #{tpu_custom_call.1} parent=1 // pred_check
      _
    $region23: #{tpu_custom_call.1} parent=1 // pred_check_branch
      %252 = sbr.rel (0) target = $region25
    $region24: #{tpu_custom_call.1} parent=1 // pred_region
      %253 = dma.done [#allocation4], 128
    $region25: #{tpu_custom_call.1} parent=1 // pred_fallthru
      _
    %254 = vsyncpa [#allocation3], 1
    %255 = vsyncpa [#allocation6], 1
    %256 = vsyncpa [#allocation4], 1

</llo_original>
